<compile_context>
chip_gen: v7x
topology: tpu7x:2x2x1
jax: 0.10.0
libtpu: 0.0.40
codegen_flags: <defaults>
</compile_context>

<pallas_src>
import math

import jax
import jax.numpy as jnp
from jax import lax
from jax.experimental import pallas as pl
from jax.experimental.pallas import tpu as pltpu


_NORM_EPS = 1e-12   # F.normalize default eps
_CLIP_EPS = 1e-6    # clamp used by the torch module
_NEG_BIG = -1e30    # mask value for padded class columns


def _round_up(x: int, m: int) -> int:
    return ((x + m - 1) // m) * m


def _make_arcface_kernel(margin: float, scale: float, num_classes: int,
                         class_tile: int, batch: int, needs_mask: bool):
    cos_m = float(math.cos(margin))
    sin_m = float(math.sin(margin))
    inv_b = 1.0 / float(batch)
    scale = float(scale)

    def kernel(emb_ref, w_ref, labels_ref, out_ref,
               inv_e_scr, m_scr, l_scr, tgt_scr):
        c = pl.program_id(0)
        n_tiles = pl.num_programs(0)

        emb = emb_ref[...]              # (B, E)  f32 (resident)
        w = w_ref[...]                  # (TC, E) f32 (raw, un-normalized tile)
        labels = labels_ref[...]        # (B, 1)  int32

        b, e_dim = emb.shape
        tc = w.shape[0]
        c_base = c * tc

        @pl.when(c == 0)
        def _init():
            esq = jnp.sum(emb * emb, axis=-1, keepdims=True)
            # 1 / max(||e||, eps) == rsqrt(max(||e||^2, eps^2))
            inv_e_scr[...] = lax.rsqrt(jnp.maximum(esq, _NORM_EPS * _NORM_EPS))
            m_scr[...] = jnp.full(m_scr.shape, -jnp.inf, jnp.float32)
            l_scr[...] = jnp.zeros(l_scr.shape, jnp.float32)
            tgt_scr[...] = jnp.zeros(tgt_scr.shape, jnp.float32)

        # Per-class inverse norms as a lane-dense (1, TC) row; the reduce over
        # E runs on the MXU (plenty of slack at small B) instead of the XLU.
        ones_row = jnp.ones((1, e_dim), jnp.float32)
        w_sumsq = lax.dot_general(
            ones_row, w * w,
            dimension_numbers=(((1,), (1,)), ((), ())),
            preferred_element_type=jnp.float32)                    # (1, TC)
        inv_w = lax.rsqrt(jnp.maximum(w_sumsq, _NORM_EPS * _NORM_EPS))

        # cosine = normalize(emb) @ normalize(W)^T computed as the raw matmul
        # (contracting the last dims of both operands -> no transpose of W)
        # scaled afterwards by the row/column inverse norms.
        dots = lax.dot_general(
            emb, w,
            dimension_numbers=(((1,), (1,)), ((), ())),
            preferred_element_type=jnp.float32)                    # (B, TC)
        cosine = dots * inv_e_scr[...] * inv_w

        # Per-tile one-hot from global class ids.
        col = lax.broadcasted_iota(jnp.int32, (b, tc), 1) + c_base
        onehot = (col == labels).astype(jnp.float32)               # (B, TC)
        # Does this row's label fall in this class tile?  (no cross-lane reduce)
        in_tile = jnp.logical_and(labels >= c_base,
                                  labels < c_base + tc).astype(jnp.float32)

        target_cos = jnp.sum(cosine * onehot, axis=-1, keepdims=True)  # (B, 1)
        t = jnp.clip(target_cos, -1.0 + _CLIP_EPS, 1.0 - _CLIP_EPS)
        # cos(acos(t) + m) = t*cos(m) - sqrt(1 - t^2)*sin(m)
        modified = t * cos_m - jnp.sqrt(jnp.maximum(1.0 - t * t, 0.0)) * sin_m
        diff = modified - target_cos                                   # (B, 1)

        logits = (cosine + onehot * diff) * scale                      # (B, TC)
        if needs_mask:
            logits = jnp.where(col < num_classes, logits, _NEG_BIG)

        # Online logsumexp update.
        tile_max = jnp.max(logits, axis=-1, keepdims=True)
        m_new = jnp.maximum(m_scr[...], tile_max)
        alpha = jnp.exp(m_scr[...] - m_new)
        l_scr[...] = alpha * l_scr[...] + jnp.sum(jnp.exp(logits - m_new),
                                                  axis=-1, keepdims=True)
        m_scr[...] = m_new
        # Target logit is algebraically modified*scale (only for the tile that
        # actually contains the row's label) -> no second masked reduction.
        tgt_scr[...] = tgt_scr[...] + in_tile * (modified * scale)

        @pl.when(c == n_tiles - 1)
        def _finalize():
            lse = m_scr[...] + jnp.log(l_scr[...])
            per_example = lse - tgt_scr[...]                           # (B, 1)
            out_ref[...] = jnp.sum(per_example, keepdims=True) * inv_b

    return kernel


def arcface_loss(embeddings, W, labels, *, margin=0.5, scale=10.0,
                 class_tile=2048):
    """embeddings: (B, E) f32, W: (C, E) f32, labels: (B,) int -> scalar f32."""
    embeddings = embeddings.astype(jnp.float32)
    W = W.astype(jnp.float32)
    B, E = embeddings.shape
    C, E_w = W.shape
    assert E == E_w

    # Class-tile size: multiple of 128 (lane-dense), no larger than needed.
    tc = _round_up(min(int(class_tile), _round_up(C, 128)), 128)
    c_pad = _round_up(C, tc)
    num_tiles = c_pad // tc
    if c_pad != C:
        W = jnp.pad(W, ((0, c_pad - C), (0, 0)))   # padded classes masked in-kernel

    labels2d = labels.astype(jnp.int32).reshape(B, 1)

    kernel = _make_arcface_kernel(margin, scale, C, tc, B, c_pad != C)

    grid_spec = pltpu.PrefetchScalarGridSpec(
        num_scalar_prefetch=0,
        grid=(num_tiles,),
        in_specs=[
            pl.BlockSpec((B, E), lambda c: (0, 0)),     # embeddings (resident)
            pl.BlockSpec((tc, E), lambda c: (c, 0)),    # W class tiles (streamed)
            pl.BlockSpec((B, 1), lambda c: (0, 0)),     # labels (resident)
        ],
        out_specs=pl.BlockSpec((1, 1), lambda c: (0, 0)),
        scratch_shapes=[
            pltpu.VMEM((B, 1), jnp.float32),   # inverse embedding norms
            pltpu.VMEM((B, 1), jnp.float32),   # running max (online LSE)
            pltpu.VMEM((B, 1), jnp.float32),   # running sum (online LSE)
            pltpu.VMEM((B, 1), jnp.float32),   # target-logit accumulator
        ],
    )

    out = pl.pallas_call(
        kernel,
        out_shape=jax.ShapeDtypeStruct((1, 1), jnp.float32),
        grid_spec=grid_spec,
        compiler_params=pltpu.CompilerParams(
            dimension_semantics=("arbitrary",)),
    )(embeddings, W, labels2d)
    return out[0, 0]


if __name__ == "__main__":
    num_classes = 576
    embedding_size = 128
    batch = 8
    margin = 0.5
    scale = 10.0

    key = jax.random.PRNGKey(0)
    k_emb, k_w, k_lab = jax.random.split(key, 3)

    embeddings = jax.random.normal(k_emb, (batch, embedding_size),
                                   dtype=jnp.float32)

    # xavier_normal_ init for W: std = sqrt(2 / (fan_in + fan_out))
    xavier_std = math.sqrt(2.0 / (num_classes + embedding_size))
    W = xavier_std * jax.random.normal(k_w, (num_classes, embedding_size),
                                       dtype=jnp.float32)

    labels = jax.random.randint(k_lab, (batch,), 0, num_classes,
                                dtype=jnp.int32)

    # class_tile=256 so the demo exercises the multi-tile online-logsumexp
    # path (3 class tiles, last one padded/masked).
    loss = arcface_loss(embeddings, W, labels, margin=margin, scale=scale,
                        class_tile=256)
    jax.block_until_ready(loss)

    # Pure-JAX reference (faithful to the PyTorch module).
    def ref(emb, W, labels):
        emb_n = emb / jnp.maximum(jnp.linalg.norm(emb, axis=1, keepdims=True),
                                  1e-12)
        w_n = W / jnp.maximum(jnp.linalg.norm(W, axis=1, keepdims=True), 1e-12)
        cosine = emb_n @ w_n.T
        onehot = jax.nn.one_hot(labels, num_classes, dtype=jnp.float32)
        tgt = jnp.sum(cosine * onehot, axis=1, keepdims=True)
        t = jnp.clip(tgt, -1 + 1e-6, 1 - 1e-6)
        mod = jnp.cos(jnp.arccos(t) + margin)
        logits = (cosine + onehot * (mod - tgt)) * scale
        logp = jax.nn.log_softmax(logits, axis=1)
        return -jnp.mean(jnp.sum(logp * onehot, axis=1))

    ref_loss = ref(embeddings, W, labels)
    # 5e-3: the kernel's MXU matmul runs at hardware default precision and
    # normalizes after the matmul, so bit-level agreement with the f32
    # reference is not expected.
    assert jnp.allclose(loss, ref_loss, atol=5e-3, rtol=5e-3), (loss, ref_loss)

    print("KERNEL_OK")
</pallas_src>

<mosaic_0001>
module attributes {stable_mosaic.version = 11 : i64} {
  func.func @kernel(%arg0: i32, %arg1: memref<8x128xf32, #tpu.memory_space<vmem>>, %arg2: memref<256x128xf32, #tpu.memory_space<vmem>>, %arg3: memref<8x1xi32, #tpu.memory_space<vmem>>, %arg4: memref<1x1xf32, #tpu.memory_space<vmem>>, %arg5: memref<8x1xf32, #tpu.memory_space<vmem>>, %arg6: memref<8x1xf32, #tpu.memory_space<vmem>>, %arg7: memref<8x1xf32, #tpu.memory_space<vmem>>, %arg8: memref<8x1xf32, #tpu.memory_space<vmem>>) attributes {dimension_semantics = [#tpu.dimension_semantics<arbitrary>], iteration_bounds = array<i64: 3>, scalar_prefetch = 0 : i64, scratch_operands = 4 : i64, tpu.core_type = #tpu.core_type<tc>, window_params = [{pipeline_mode = #tpu.pipeline_mode<synchronous>, transform_indices = @transform_0, window_bounds = array<i64: 8, 128>}, {transform_indices = @transform_1, window_bounds = array<i64: 256, 128>}, {pipeline_mode = #tpu.pipeline_mode<synchronous>, transform_indices = @transform_2, window_bounds = array<i64: 8, 1>}, {pipeline_mode = #tpu.pipeline_mode<synchronous>, transform_indices = @transform_3, window_bounds = array<i64: 1, 1>}]} {
    %c0 = arith.constant 0 : index
    %c0_0 = arith.constant 0 : index
    %0 = vector.load %arg1[%c0, %c0_0] : memref<8x128xf32, #tpu.memory_space<vmem>>, vector<8x128xf32>
    %c0_1 = arith.constant 0 : index
    %c0_2 = arith.constant 0 : index
    %1 = vector.load %arg2[%c0_1, %c0_2] : memref<256x128xf32, #tpu.memory_space<vmem>>, vector<256x128xf32>
    %c0_3 = arith.constant 0 : index
    %c0_4 = arith.constant 0 : index
    %2 = vector.load %arg3[%c0_3, %c0_4] : memref<8x1xi32, #tpu.memory_space<vmem>>, vector<8x1xi32>
    %c256_i32 = arith.constant 256 : i32
    %3 = arith.muli %arg0, %c256_i32 : i32
    %c0_i32 = arith.constant 0 : i32
    %4 = arith.cmpi eq, %arg0, %c0_i32 : i32
    %5 = arith.extui %4 : i1 to i32
    %c0_i32_5 = arith.constant 0 : i32
    %6 = arith.cmpi ne, %5, %c0_i32_5 : i32
    scf.if %6 {
      %88 = arith.mulf %0, %0 : vector<8x128xf32>
      %cst_39 = arith.constant dense<0.000000e+00> : vector<8xf32>
      %89 = vector.multi_reduction <add>, %88, %cst_39 [1] : vector<8x128xf32> to vector<8xf32>
      %90 = vector.shape_cast %89 : vector<8xf32> to vector<8x1xf32>
      %cst_40 = arith.constant 1.000000e-24 : f32
      %91 = vector.broadcast %cst_40 : f32 to vector<8x1xf32>
      %92 = arith.maximumf %90, %91 : vector<8x1xf32>
      %93 = math.rsqrt %92 : vector<8x1xf32>
      %c0_41 = arith.constant 0 : index
      %c0_42 = arith.constant 0 : index
      %94 = vector.load %arg5[%c0_41, %c0_42] : memref<8x1xf32, #tpu.memory_space<vmem>>, vector<8x1xf32>
      tpu.vector_store %arg5[%c0_41, %c0_42], %93 {strides = array<i32>} : memref<8x1xf32, #tpu.memory_space<vmem>>, vector<8x1xf32>,
      %cst_43 = arith.constant 0xFF800000 : f32
      %95 = vector.broadcast %cst_43 : f32 to vector<8x1xf32>
      %c0_44 = arith.constant 0 : index
      %c0_45 = arith.constant 0 : index
      %96 = vector.load %arg6[%c0_44, %c0_45] : memref<8x1xf32, #tpu.memory_space<vmem>>, vector<8x1xf32>
      tpu.vector_store %arg6[%c0_44, %c0_45], %95 {strides = array<i32>} : memref<8x1xf32, #tpu.memory_space<vmem>>, vector<8x1xf32>,
      %cst_46 = arith.constant 0.000000e+00 : f32
      %97 = vector.broadcast %cst_46 : f32 to vector<8x1xf32>
      %c0_47 = arith.constant 0 : index
      %c0_48 = arith.constant 0 : index
      %98 = vector.load %arg7[%c0_47, %c0_48] : memref<8x1xf32, #tpu.memory_space<vmem>>, vector<8x1xf32>
      tpu.vector_store %arg7[%c0_47, %c0_48], %97 {strides = array<i32>} : memref<8x1xf32, #tpu.memory_space<vmem>>, vector<8x1xf32>,
      %cst_49 = arith.constant 0.000000e+00 : f32
      %99 = vector.broadcast %cst_49 : f32 to vector<8x1xf32>
      %c0_50 = arith.constant 0 : index
      %c0_51 = arith.constant 0 : index
      %100 = vector.load %arg8[%c0_50, %c0_51] : memref<8x1xf32, #tpu.memory_space<vmem>>, vector<8x1xf32>
      tpu.vector_store %arg8[%c0_50, %c0_51], %99 {strides = array<i32>} : memref<8x1xf32, #tpu.memory_space<vmem>>, vector<8x1xf32>,
    } else {
    }
    %cst = arith.constant 1.000000e+00 : f32
    %7 = vector.broadcast %cst : f32 to vector<1x128xf32>
    %8 = arith.mulf %1, %1 : vector<256x128xf32>
    %cst_6 = arith.constant dense<0.000000e+00> : vector<1x256xf32>
    %9 = tpu.matmul %7, %8, %cst_6 {dimension_numbers = #tpu.dot_dimension_numbers<[1], [1], [0], [0], [0, 0, 1, 0], [], []>} : vector<1x128xf32>, vector<256x128xf32>, vector<1x256xf32> -> vector<1x256xf32>
    %cst_7 = arith.constant 1.000000e-24 : f32
    %10 = vector.broadcast %cst_7 : f32 to vector<1x256xf32>
    %11 = arith.maximumf %9, %10 : vector<1x256xf32>
    %12 = math.rsqrt %11 : vector<1x256xf32>
    %cst_8 = arith.constant dense<0.000000e+00> : vector<8x256xf32>
    %13 = tpu.matmul %0, %1, %cst_8 {dimension_numbers = #tpu.dot_dimension_numbers<[1], [1], [0], [0], [0, 0, 1, 0], [], []>} : vector<8x128xf32>, vector<256x128xf32>, vector<8x256xf32> -> vector<8x256xf32>
    %c0_9 = arith.constant 0 : index
    %c0_10 = arith.constant 0 : index
    %14 = vector.load %arg5[%c0_9, %c0_10] : memref<8x1xf32, #tpu.memory_space<vmem>>, vector<8x1xf32>
    %15 = vector.broadcast %14 : vector<8x1xf32> to vector<8x256xf32>
    %16 = arith.mulf %13, %15 : vector<8x256xf32>
    %17 = vector.broadcast %12 : vector<1x256xf32> to vector<8x256xf32>
    %18 = arith.mulf %16, %17 : vector<8x256xf32>
    %19 = tpu.iota {dimensions = array<i32: 1>} : vector<8x256xi32>
    %20 = vector.broadcast %3 : i32 to vector<8x256xi32>
    %21 = arith.addi %19, %20 : vector<8x256xi32>
    %22 = vector.broadcast %2 : vector<8x1xi32> to vector<8x256xi32>
    %23 = arith.cmpi eq, %21, %22 : vector<8x256xi32>
    %24 = arith.extui %23 : vector<8x256xi1> to vector<8x256xi32>
    %25 = arith.sitofp %24 : vector<8x256xi32> to vector<8x256xf32>
    %26 = vector.broadcast %3 : i32 to vector<8x1xi32>
    %27 = arith.cmpi sge, %2, %26 : vector<8x1xi32>
    %c256_i32_11 = arith.constant 256 : i32
    %28 = arith.addi %3, %c256_i32_11 : i32
    %29 = vector.broadcast %28 : i32 to vector<8x1xi32>
    %30 = arith.cmpi slt, %2, %29 : vector<8x1xi32>
    %31 = arith.andi %27, %30 : vector<8x1xi1>
    %32 = arith.extui %31 : vector<8x1xi1> to vector<8x1xi32>
    %33 = arith.sitofp %32 : vector<8x1xi32> to vector<8x1xf32>
    %34 = arith.mulf %18, %25 : vector<8x256xf32>
    %cst_12 = arith.constant dense<0.000000e+00> : vector<8xf32>
    %35 = vector.multi_reduction <add>, %34, %cst_12 [1] : vector<8x256xf32> to vector<8xf32>
    %36 = vector.shape_cast %35 : vector<8xf32> to vector<8x1xf32>
    %cst_13 = arith.constant -0.999998986 : f32
    %cst_14 = arith.constant 0.999998986 : f32
    %37 = vector.broadcast %cst_13 : f32 to vector<8x1xf32>
    %38 = arith.maximumf %37, %36 : vector<8x1xf32>
    %39 = vector.broadcast %cst_14 : f32 to vector<8x1xf32>
    %40 = arith.minimumf %39, %38 : vector<8x1xf32>
    %cst_15 = arith.constant 0.87758255 : f32
    %41 = vector.broadcast %cst_15 : f32 to vector<8x1xf32>
    %42 = arith.mulf %40, %41 : vector<8x1xf32>
    %43 = arith.mulf %40, %40 : vector<8x1xf32>
    %cst_16 = arith.constant 1.000000e+00 : f32
    %44 = vector.broadcast %cst_16 : f32 to vector<8x1xf32>
    %45 = arith.subf %44, %43 : vector<8x1xf32>
    %cst_17 = arith.constant 0.000000e+00 : f32
    %46 = vector.broadcast %cst_17 : f32 to vector<8x1xf32>
    %47 = arith.maximumf %45, %46 : vector<8x1xf32>
    %48 = math.sqrt %47 : vector<8x1xf32>
    %cst_18 = arith.constant 0.47942555 : f32
    %49 = vector.broadcast %cst_18 : f32 to vector<8x1xf32>
    %50 = arith.mulf %48, %49 : vector<8x1xf32>
    %51 = arith.subf %42, %50 : vector<8x1xf32>
    %52 = arith.subf %51, %36 : vector<8x1xf32>
    %53 = vector.broadcast %52 : vector<8x1xf32> to vector<8x256xf32>
    %54 = arith.mulf %25, %53 : vector<8x256xf32>
    %55 = arith.addf %18, %54 : vector<8x256xf32>
    %cst_19 = arith.constant 1.000000e+01 : f32
    %56 = vector.broadcast %cst_19 : f32 to vector<8x256xf32>
    %57 = arith.mulf %55, %56 : vector<8x256xf32>
    %c576_i32 = arith.constant 576 : i32
    %58 = vector.broadcast %c576_i32 : i32 to vector<8x256xi32>
    %59 = arith.cmpi slt, %21, %58 : vector<8x256xi32>
    %cst_20 = arith.constant -1.000000e+30 : f32
    %60 = vector.broadcast %cst_20 : f32 to vector<8x256xf32>
    %61 = arith.select %59, %57, %60 : vector<8x256xi1>, vector<8x256xf32>
    %cst_21 = arith.constant dense<0xFF800000> : vector<8xf32>
    %62 = vector.multi_reduction <maximumf>, %61, %cst_21 [1] : vector<8x256xf32> to vector<8xf32>
    %63 = vector.shape_cast %62 : vector<8xf32> to vector<8x1xf32>
    %c0_22 = arith.constant 0 : index
    %c0_23 = arith.constant 0 : index
    %64 = vector.load %arg6[%c0_22, %c0_23] : memref<8x1xf32, #tpu.memory_space<vmem>>, vector<8x1xf32>
    %65 = arith.maximumf %64, %63 : vector<8x1xf32>
    %c0_24 = arith.constant 0 : index
    %c0_25 = arith.constant 0 : index
    %66 = vector.load %arg6[%c0_24, %c0_25] : memref<8x1xf32, #tpu.memory_space<vmem>>, vector<8x1xf32>
    %67 = arith.subf %66, %65 : vector<8x1xf32>
    %68 = math.exp %67 : vector<8x1xf32>
    %c0_26 = arith.constant 0 : index
    %c0_27 = arith.constant 0 : index
    %69 = vector.load %arg7[%c0_26, %c0_27] : memref<8x1xf32, #tpu.memory_space<vmem>>, vector<8x1xf32>
    %70 = arith.mulf %68, %69 : vector<8x1xf32>
    %71 = vector.broadcast %65 : vector<8x1xf32> to vector<8x256xf32>
    %72 = arith.subf %61, %71 : vector<8x256xf32>
    %73 = math.exp %72 : vector<8x256xf32>
    %cst_28 = arith.constant dense<0.000000e+00> : vector<8xf32>
    %74 = vector.multi_reduction <add>, %73, %cst_28 [1] : vector<8x256xf32> to vector<8xf32>
    %75 = vector.shape_cast %74 : vector<8xf32> to vector<8x1xf32>
    %76 = arith.addf %70, %75 : vector<8x1xf32>
    %c0_29 = arith.constant 0 : index
    %c0_30 = arith.constant 0 : index
    %77 = vector.load %arg7[%c0_29, %c0_30] : memref<8x1xf32, #tpu.memory_space<vmem>>, vector<8x1xf32>
    tpu.vector_store %arg7[%c0_29, %c0_30], %76 {strides = array<i32>} : memref<8x1xf32, #tpu.memory_space<vmem>>, vector<8x1xf32>,
    %c0_31 = arith.constant 0 : index
    %c0_32 = arith.constant 0 : index
    %78 = vector.load %arg6[%c0_31, %c0_32] : memref<8x1xf32, #tpu.memory_space<vmem>>, vector<8x1xf32>
    tpu.vector_store %arg6[%c0_31, %c0_32], %65 {strides = array<i32>} : memref<8x1xf32, #tpu.memory_space<vmem>>, vector<8x1xf32>,
    %c0_33 = arith.constant 0 : index
    %c0_34 = arith.constant 0 : index
    %79 = vector.load %arg8[%c0_33, %c0_34] : memref<8x1xf32, #tpu.memory_space<vmem>>, vector<8x1xf32>
    %cst_35 = arith.constant 1.000000e+01 : f32
    %80 = vector.broadcast %cst_35 : f32 to vector<8x1xf32>
    %81 = arith.mulf %51, %80 : vector<8x1xf32>
    %82 = arith.mulf %33, %81 : vector<8x1xf32>
    %83 = arith.addf %79, %82 : vector<8x1xf32>
    %c0_36 = arith.constant 0 : index
    %c0_37 = arith.constant 0 : index
    %84 = vector.load %arg8[%c0_36, %c0_37] : memref<8x1xf32, #tpu.memory_space<vmem>>, vector<8x1xf32>
    tpu.vector_store %arg8[%c0_36, %c0_37], %83 {strides = array<i32>} : memref<8x1xf32, #tpu.memory_space<vmem>>, vector<8x1xf32>,
    %c2_i32 = arith.constant 2 : i32
    %85 = arith.cmpi eq, %arg0, %c2_i32 : i32
    %86 = arith.extui %85 : i1 to i32
    %c0_i32_38 = arith.constant 0 : i32
    %87 = arith.cmpi ne, %86, %c0_i32_38 : i32
    scf.if %87 {
      %c0_39 = arith.constant 0 : index
      %c0_40 = arith.constant 0 : index
      %88 = vector.load %arg6[%c0_39, %c0_40] : memref<8x1xf32, #tpu.memory_space<vmem>>, vector<8x1xf32>
      %c0_41 = arith.constant 0 : index
      %c0_42 = arith.constant 0 : index
      %89 = vector.load %arg7[%c0_41, %c0_42] : memref<8x1xf32, #tpu.memory_space<vmem>>, vector<8x1xf32>
      %90 = math.log %89 : vector<8x1xf32>
      %91 = arith.addf %88, %90 : vector<8x1xf32>
      %c0_43 = arith.constant 0 : index
      %c0_44 = arith.constant 0 : index
      %92 = vector.load %arg8[%c0_43, %c0_44] : memref<8x1xf32, #tpu.memory_space<vmem>>, vector<8x1xf32>
      %93 = arith.subf %91, %92 : vector<8x1xf32>
      %94 = vector.shape_cast %93 : vector<8x1xf32> to vector<1x8x1xf32>
      %cst_45 = arith.constant dense<0.000000e+00> : vector<1xf32>
      %95 = vector.multi_reduction <add>, %94, %cst_45 [1, 2] : vector<1x8x1xf32> to vector<1xf32>
      %96 = vector.shape_cast %95 : vector<1xf32> to vector<1x1x1xf32>
      %97 = vector.extract %96[0, 0, 0] : f32 from vector<1x1x1xf32>
      %98 = vector.broadcast %97 : f32 to vector<1x1xf32>
      %cst_46 = arith.constant 1.250000e-01 : f32
      %99 = vector.broadcast %cst_46 : f32 to vector<1x1xf32>
      %100 = arith.mulf %98, %99 : vector<1x1xf32>
      %c0_47 = arith.constant 0 : index
      %c0_48 = arith.constant 0 : index
      %101 = vector.load %arg4[%c0_47, %c0_48] : memref<1x1xf32, #tpu.memory_space<vmem>>, vector<1x1xf32>
      tpu.vector_store %arg4[%c0_47, %c0_48], %100 {strides = array<i32>} : memref<1x1xf32, #tpu.memory_space<vmem>>, vector<1x1xf32>,
    } else {
    }
    return
  }
  func.func @transform_0(%arg0: i32) -> (i32, i32) {
    %c0_i32 = arith.constant 0 : i32
    %c0_i32_0 = arith.constant 0 : i32
    %c0_i32_1 = arith.constant 0 : i32
    return %c0_i32, %c0_i32_0 : i32, i32
  }
  func.func @transform_1(%arg0: i32) -> (i32, i32) {
    %c0_i32 = arith.constant 0 : i32
    %c0_i32_0 = arith.constant 0 : i32
    return %arg0, %c0_i32 : i32, i32
  }
  func.func @transform_2(%arg0: i32) -> (i32, i32) {
    %c0_i32 = arith.constant 0 : i32
    %c0_i32_0 = arith.constant 0 : i32
    %c0_i32_1 = arith.constant 0 : i32
    return %c0_i32, %c0_i32_0 : i32, i32
  }
  func.func @transform_3(%arg0: i32) -> (i32, i32) {
    %c0_i32 = arith.constant 0 : i32
    %c0_i32_0 = arith.constant 0 : i32
    %c0_i32_1 = arith.constant 0 : i32
    return %c0_i32, %c0_i32_0 : i32, i32
  }
}

</mosaic_0001>

<llo_original>
// kernel: tpu_custom_call.1
$region0: #{tpu_custom_call.1}
  #allocation0 [shape = 'u32[]', space=smem, size = 0x4, offset = 0x4, fixed_abs, tag = 'smem constant byte address 0x4 - core index']
  #allocation1 [shape = 'u32[144,128]{1,0:T(1,128)}', space=vmem, size = 0x12000, scoped, tag = 'internal scratch']
  #allocation2 [shape = 'f32[8,1]{1,0:T(8,128)}', space=vmem, size = 0x1000, scoped, tag = 'scratch operand']
  #allocation3 [shape = 'f32[8,1]{1,0:T(8,128)}', space=vmem, size = 0x1000, scoped, tag = 'scratch operand']
  #allocation4 [shape = 'f32[8,1]{1,0:T(8,128)}', space=vmem, size = 0x1000, scoped, tag = 'scratch operand']
  #allocation5 [shape = 'f32[8,1]{1,0:T(8,128)}', space=vmem, size = 0x1000, scoped, tag = 'scratch operand']
  %s0 = inlined_call_operand.vmem [shape: f32[8,128], index: 0, kind: input, shape index: {}]
  %s1 = inlined_call_operand.hbm [shape: f32[768,128], index: 1, kind: input, shape index: {}]
  %s2 = inlined_call_operand.vmem [shape: s32[8,1], index: 2, kind: input, shape index: {}]
  %s3 = inlined_call_operand.hbm [shape: f32[1,1], index: 3, kind: output, shape index: {}]
  %s4 = sld [smem:[#allocation0]]
  $region57: #{tpu_custom_call.1} parent=0
    _
  %s6 = ssub.s32 1, %s4
  %s7 = scalar_select 0, %s6, %s4
  $region1: #{tpu_custom_call.1} parent=0
    #allocation6 [shape = 'u8[262144]{0}', space=vmem, size = 0x40000, scoped, tag = 'input window, operand 1']
    #allocation7 [shape = 's32[2]{0}', space=sflag, size = 0x8, scoped, tag = 'scoped memory for tpu_custom_call.1']
    #allocation8 [shape = 's32[2]{0}', space=sflag, size = 0x8, scoped, tag = 'scoped memory for tpu_custom_call.1']
    #allocation9 [shape = 'u8[512]{0}', space=vmem, size = 0x400, scoped, tag = 'output window, operand 0, single buffered']
    %8 = vsyncpa [#allocation7], 0
    %s9 = scalar_lea.sflag [#allocation7], 1
    %10 = vsyncpa %s9, 0
    %11 = vsyncpa [#allocation8], 0
    loop: start=0, step=1, limit=5
    $region2: #{tpu_custom_call.1} parent=1 // loop_pre_header
      _
    $region3: #{tpu_custom_call.1} parent=1 // loop_header
      %s13 = sphi 0, %s17
      %p14 = scmp.ge.s32.totalorder %s13, 5
      %s21 = sphi 0, %s21
      %s23 = sphi 0, %s21
      %s24 = sphi 0, %s23
      %s38 = sphi 0, %s24
      %s44 = sphi 0, %s46
      %s47 = sphi 0, %s44
      %s48 = sphi 0, %s47
      %s64 = sphi 0, %s48
      %s68 = sphi 0, %s68
      %s70 = sphi 0, %s68
      %s71 = sphi 0, %s70
      %s85 = sphi 0, %s71
      %s89 = sphi 0, %s89
      %s91 = sphi 0, %s89
      %s92 = sphi 0, %s91
      %s106 = sphi 0, %s92
    $region4: #{tpu_custom_call.1} parent=1 // loop_header_branch
      %16 = sbr.rel (%p14) target = $region8
    $region5: #{tpu_custom_call.1} parent=1 // loop_body
      %s18 = ssub.s32 %s13, 1
      %s19 = ssub.s32 %s13, 2
      %s20 = sadd.s32 %s13, 1
      %s22 = sadd.s32 %s21, 1
      %p25 = scmp.eq.s32.totalorder %s13, 2
      %p26 = scmp.ne.s32.totalorder %s21, %s23
      %p27 = scmp.eq.s32.totalorder %s13, 0
      %p28 = por %p26, %p27
      %p29 = scmp.ne.s32.totalorder %s21, %s23
      %p30 = scmp.eq.s32.totalorder %s18, 2
      %p31 = por %p29, %p30
      %p32 = scmp.ne.s32.totalorder %s23, %s24
      %p33 = scmp.eq.s32.totalorder %s18, 0
      %p34 = por %p32, %p33
      %p35 = scmp.ne.s32.totalorder %s23, %s24
      %p36 = scmp.eq.s32.totalorder %s19, 2
      %p37 = por %p35, %p36
      %p39 = scmp.ne.s32.totalorder %s24, %s38
      %p40 = scmp.eq.s32.totalorder %s19, 0
      %p41 = por %p39, %p40
      %s42 = ssub.s32 %s13, %s20
      %p43 = scmp.eq.s32.totalorder %s42, 0
      %s45 = sadd.s32 %s44, 1
      %s46 = scalar_select %p43, %s44, %s45
      %p49 = pneg %p43
      %p50 = scmp.eq.s32.totalorder %s13, 2
      %p51 = por %p49, %p50
      %p52 = scmp.ne.s32.totalorder %s44, %s47
      %p53 = scmp.eq.s32.totalorder %s13, 0
      %p54 = por %p52, %p53
      %p55 = scmp.ne.s32.totalorder %s44, %s47
      %p56 = scmp.eq.s32.totalorder %s18, 2
      %p57 = por %p55, %p56
      %p58 = scmp.ne.s32.totalorder %s47, %s48
      %p59 = scmp.eq.s32.totalorder %s18, 0
      %p60 = por %p58, %p59
      %p61 = scmp.ne.s32.totalorder %s47, %s48
      %p62 = scmp.eq.s32.totalorder %s19, 2
      %p63 = por %p61, %p62
      %p65 = scmp.ne.s32.totalorder %s48, %s64
      %p66 = scmp.eq.s32.totalorder %s19, 0
      %p67 = por %p65, %p66
      %s69 = sadd.s32 %s68, 1
      %p72 = scmp.eq.s32.totalorder %s13, 2
      %p73 = scmp.ne.s32.totalorder %s68, %s70
      %p74 = scmp.eq.s32.totalorder %s13, 0
      %p75 = por %p73, %p74
      %p76 = scmp.ne.s32.totalorder %s68, %s70
      %p77 = scmp.eq.s32.totalorder %s18, 2
      %p78 = por %p76, %p77
      %p79 = scmp.ne.s32.totalorder %s70, %s71
      %p80 = scmp.eq.s32.totalorder %s18, 0
      %p81 = por %p79, %p80
      %p82 = scmp.ne.s32.totalorder %s70, %s71
      %p83 = scmp.eq.s32.totalorder %s19, 2
      %p84 = por %p82, %p83
      %p86 = scmp.ne.s32.totalorder %s71, %s85
      %p87 = scmp.eq.s32.totalorder %s19, 0
      %p88 = por %p86, %p87
      %s90 = sadd.s32 %s89, 1
      %p93 = scmp.eq.s32.totalorder %s13, 2
      %p94 = scmp.ne.s32.totalorder %s89, %s91
      %p95 = scmp.eq.s32.totalorder %s13, 0
      %p96 = por %p94, %p95
      %p97 = scmp.ne.s32.totalorder %s89, %s91
      %p98 = scmp.eq.s32.totalorder %s18, 2
      %p99 = por %p97, %p98
      %p100 = scmp.ne.s32.totalorder %s91, %s92
      %p101 = scmp.eq.s32.totalorder %s18, 0
      %p102 = por %p100, %p101
      %p103 = scmp.ne.s32.totalorder %s91, %s92
      %p104 = scmp.eq.s32.totalorder %s19, 2
      %p105 = por %p103, %p104
      %p107 = scmp.ne.s32.totalorder %s92, %s106
      %p108 = scmp.eq.s32.totalorder %s19, 0
      %p109 = por %p107, %p108
      %p110 = scmp.le.s32.totalorder 1, %s13
      %p111 = scmp.lt.s32.totalorder %s13, 4
      %p112 = pnand %p110, %p111
      %p113 = pneg %p112
      // Predicated region
      $region9: #{tpu_custom_call.1} parent=5 // pred_check
        _
      $region10: #{tpu_custom_call.1} parent=5 // pred_check_branch
        %115 = sbr.rel (%p112) target = $region12
      $region11: #{tpu_custom_call.1} parent=5 // pred_region
        %s116 = ssub.s32 %s13, 1
        // Predicated region
        $region13: #{tpu_custom_call.1} parent=11 // pred_check
          %p117 = pneg %p34
        $region14: #{tpu_custom_call.1} parent=11 // pred_check_branch
          %119 = sbr.rel (%p117) target = $region16
        $region15: #{tpu_custom_call.1} parent=11 // pred_region
          _
        $region16: #{tpu_custom_call.1} parent=11 // pred_fallthru
          _
        // Predicated region
        $region17: #{tpu_custom_call.1} parent=11 // pred_check
          %p120 = pneg %p81
        $region18: #{tpu_custom_call.1} parent=11 // pred_check_branch
          %122 = sbr.rel (%p120) target = $region20
        $region19: #{tpu_custom_call.1} parent=11 // pred_region
          _
        $region20: #{tpu_custom_call.1} parent=11 // pred_fallthru
          _
      $region12: #{tpu_custom_call.1} parent=5 // pred_fallthru
        _
      %p123 = scmp.lt.s32.totalorder %s13, 3
      // Predicated region
      $region21: #{tpu_custom_call.1} parent=5 // pred_check
        %p124 = pneg %p123
      $region22: #{tpu_custom_call.1} parent=5 // pred_check_branch
        %126 = sbr.rel (%p124) target = $region24
      $region23: #{tpu_custom_call.1} parent=5 // pred_region
        // Predicated region
        $region25: #{tpu_custom_call.1} parent=23 // pred_check
          %p127 = pneg %p54
        $region26: #{tpu_custom_call.1} parent=23 // pred_check_branch
          %129 = sbr.rel (%p127) target = $region28
        $region27: #{tpu_custom_call.1} parent=23 // pred_region
          %s130 = sand.u32 %s44, 1
          %s131 = scalar_lea.sflag [#allocation7], %s130
          %s132 = sand.u32 %s44, 1
          %s133 = smul.addr %s132, 256
          %s134 = scalar_lea.vmem [#allocation6], %s133
          %s135 = smul.u32 32, %s13
          %s137 = ssub.s32 4096, 4096
          %138 = vsyncadd %s131, %s137
          %s139 = smul.addr %s135, 128
          %s140 = scalar_lea.hbm %s1, %s139
          %s141 = sshll.u32 %s134, 4
          %s142 = int_to_ptr.vmem [resolvable:$true] %s141
          %147 = dma.hbm_to_vmem [thread:$0]  %s140, 4096, %s142, %s131, 128, 128, 8
        $region28: #{tpu_custom_call.1} parent=23 // pred_fallthru
          _
      $region24: #{tpu_custom_call.1} parent=5 // pred_fallthru
        _
      %p148 = scmp.le.s32.totalorder 1, %s13
      %p149 = scmp.lt.s32.totalorder %s13, 4
      %p150 = pnand %p148, %p149
      %p151 = pneg %p150
      // Predicated region
      $region29: #{tpu_custom_call.1} parent=5 // pred_check
        _
      $region30: #{tpu_custom_call.1} parent=5 // pred_check_branch
        %153 = sbr.rel (%p150) target = $region32
      $region31: #{tpu_custom_call.1} parent=5 // pred_region
        %s154 = ssub.s32 %s13, 1
        %s155 = sand.u32 %s47, 1
        %s156 = scalar_lea.sflag [#allocation7], %s155
        %s157 = sand.u32 %s47, 1
        %s158 = smul.addr %s157, 256
        %s159 = scalar_lea.vmem [#allocation6], %s158
        // Predicated region
        $region33: #{tpu_custom_call.1} parent=31 // pred_check
          %p160 = pneg %p60
        $region34: #{tpu_custom_call.1} parent=31 // pred_check_branch
          %162 = sbr.rel (%p160) target = $region36
        $region35: #{tpu_custom_call.1} parent=31 // pred_region
          %163 = dma.done %s156, 4096
        $region36: #{tpu_custom_call.1} parent=31 // pred_fallthru
          _
        %p164 = pneg %p34
        %p165 = pneg %p31
        %s166 = sand.u32 %s47, 1
        %s167 = scalar_lea.sflag [#allocation7], %s166
        %s168 = sand.u32 %s47, 1
        %s169 = smul.addr %s168, 256
        %s170 = scalar_lea.vmem [#allocation6], %s169
        %p171 = pneg %p60
        %p172 = pneg %p57
        %p173 = pneg %p81
        %p174 = pneg %p78
        %p175 = pneg %p102
        %p176 = pneg %p99
        %s177 = smul.u32 32, %s18
        %v178 = vld [vmem:[%s0] sm:$0xff]
        %v179 = vld [vmem:[%s159] sm:$0xff]
        %v180 = vld [vmem:[%s159 + $0x8] sm:$0xff]
        %v181 = vld [vmem:[%s159 + $0x10] sm:$0xff]
        %v182 = vld [vmem:[%s159 + $0x18] sm:$0xff]
        %v183 = vld [vmem:[%s159 + $0x20] sm:$0xff]
        %v184 = vld [vmem:[%s159 + $0x28] sm:$0xff]
        %v185 = vld [vmem:[%s159 + $0x30] sm:$0xff]
        %v186 = vld [vmem:[%s159 + $0x38] sm:$0xff]
        %v187 = vld [vmem:[%s159 + $0x40] sm:$0xff]
        %v188 = vld [vmem:[%s159 + $0x48] sm:$0xff]
        %v189 = vld [vmem:[%s159 + $0x50] sm:$0xff]
        %v190 = vld [vmem:[%s159 + $0x58] sm:$0xff]
        %v191 = vld [vmem:[%s159 + $0x60] sm:$0xff]
        %v192 = vld [vmem:[%s159 + $0x68] sm:$0xff]
        %v193 = vld [vmem:[%s159 + $0x70] sm:$0xff]
        %v194 = vld [vmem:[%s159 + $0x78] sm:$0xff]
        %v195 = vld [vmem:[%s159 + $0x80] sm:$0xff]
        %v196 = vld [vmem:[%s159 + $0x88] sm:$0xff]
        %v197 = vld [vmem:[%s159 + $0x90] sm:$0xff]
        %v198 = vld [vmem:[%s159 + $0x98] sm:$0xff]
        %v199 = vld [vmem:[%s159 + $0xa0] sm:$0xff]
        %v200 = vld [vmem:[%s159 + $0xa8] sm:$0xff]
        %v201 = vld [vmem:[%s159 + $0xb0] sm:$0xff]
        %v202 = vld [vmem:[%s159 + $0xb8] sm:$0xff]
        %v203 = vld [vmem:[%s159 + $0xc0] sm:$0xff]
        %v204 = vld [vmem:[%s159 + $0xc8] sm:$0xff]
        %v205 = vld [vmem:[%s159 + $0xd0] sm:$0xff]
        %v206 = vld [vmem:[%s159 + $0xd8] sm:$0xff]
        %v207 = vld [vmem:[%s159 + $0xe0] sm:$0xff]
        %v208 = vld [vmem:[%s159 + $0xe8] sm:$0xff]
        %v209 = vld [vmem:[%s159 + $0xf0] sm:$0xff]
        %v210 = vld [vmem:[%s159 + $0xf8] sm:$0xff]
        %v211 = vld [vmem:[%s2] sm:$0xff]
        %s212 = smul.u32 %s18, 256
        %p213 = scmp.eq.s32.totalorder %s18, 0
        // Predicated region
        $region37: #{tpu_custom_call.1} parent=31 // pred_check
          %p214 = pneg %p213
        $region38: #{tpu_custom_call.1} parent=31 // pred_check_branch
          %216 = sbr.rel (%p214) target = $region40
        $region39: #{tpu_custom_call.1} parent=31 // pred_region
          %v217 = vmul.f32 %v178, %v178
          %218 = vadd.xlane.f32.xlu0 %v217
          %v219 = vpop.xlane.xlu0 %218
          %v220 = vmax.f32 %v219, 1e-24
          %v221 = vrsqrt.pop %v220
          %vm222 = vcmask 7168
          %223 = vst.msk [vmem:[#allocation2] sm:$0xff] %vm222, %v221
          %224 = vst.msk [vmem:[#allocation3] sm:$0xff] %vm222, -inf
          %225 = vst.msk [vmem:[#allocation4] sm:$0xff] %vm222, 0.0
          %226 = vst.msk [vmem:[#allocation5] sm:$0xff] %vm222, 0.0
        $region40: #{tpu_custom_call.1} parent=31 // pred_fallthru
          _
        %v227 = vmul.f32 %v179, %v179
        %v228 = vmul.f32 %v180, %v180
        %v229 = vmul.f32 %v181, %v181
        %v230 = vmul.f32 %v182, %v182
        %v231 = vmul.f32 %v183, %v183
        %v232 = vmul.f32 %v184, %v184
        %v233 = vmul.f32 %v185, %v185
        %v234 = vmul.f32 %v186, %v186
        %v235 = vmul.f32 %v187, %v187
        %v236 = vmul.f32 %v188, %v188
        %v237 = vmul.f32 %v189, %v189
        %v238 = vmul.f32 %v190, %v190
        %v239 = vmul.f32 %v191, %v191
        %v240 = vmul.f32 %v192, %v192
        %v241 = vmul.f32 %v193, %v193
        %v242 = vmul.f32 %v194, %v194
        %v243 = vmul.f32 %v195, %v195
        %v244 = vmul.f32 %v196, %v196
        %v245 = vmul.f32 %v197, %v197
        %v246 = vmul.f32 %v198, %v198
        %v247 = vmul.f32 %v199, %v199
        %v248 = vmul.f32 %v200, %v200
        %v249 = vmul.f32 %v201, %v201
        %v250 = vmul.f32 %v202, %v202
        %v251 = vmul.f32 %v203, %v203
        %v252 = vmul.f32 %v204, %v204
        %v253 = vmul.f32 %v205, %v205
        %v254 = vmul.f32 %v206, %v206
        %v255 = vmul.f32 %v207, %v207
        %v256 = vmul.f32 %v208, %v208
        %v257 = vmul.f32 %v209, %v209
        %v258 = vmul.f32 %v210, %v210
        %259 = vmatprep.subr.mxu0 0.0
        %260 = vmatpush1.xpose.msra.mxu0 %v227
        %261 = vmatprep.subr.mxu0 0.0
        %262 = vmatpush1.xpose.msra.mxu0 %v228
        %263 = vmatprep.subr.mxu0 0.0
        %264 = vmatpush1.xpose.msra.mxu0 %v229
        %265 = vmatprep.subr.mxu0 0.0
        %266 = vmatpush1.xpose.msra.mxu0 %v230
        %267 = vmatprep.subr.mxu0 0.0
        %268 = vmatpush1.xpose.msra.mxu0 %v231
        %269 = vmatprep.subr.mxu0 0.0
        %270 = vmatpush1.xpose.msra.mxu0 %v232
        %271 = vmatprep.subr.mxu0 0.0
        %272 = vmatpush1.xpose.msra.mxu0 %v233
        %273 = vmatprep.subr.mxu0 0.0
        %274 = vmatpush1.xpose.msra.mxu0 %v234
        %275 = vmatprep.subr.mxu0 0.0
        %276 = vmatpush1.xpose.msra.mxu0 %v235
        %277 = vmatprep.subr.mxu0 0.0
        %278 = vmatpush1.xpose.msra.mxu0 %v236
        %279 = vmatprep.subr.mxu0 0.0
        %280 = vmatpush1.xpose.msra.mxu0 %v237
        %281 = vmatprep.subr.mxu0 0.0
        %282 = vmatpush1.xpose.msra.mxu0 %v238
        %283 = vmatprep.subr.mxu0 0.0
        %284 = vmatpush1.xpose.msra.mxu0 %v239
        %285 = vmatprep.subr.mxu0 0.0
        %286 = vmatpush1.xpose.msra.mxu0 %v240
        %287 = vmatprep.subr.mxu0 0.0
        %288 = vmatpush1.xpose.msra.mxu0 %v241
        %289 = vmatprep.subr.mxu0 0.0
        %290 = vmatpush1.xpose.msra.mxu0 %v242
        %291 = vmatprep.subr.mxu0 0.0
        %292 = vmatpush1.xpose.msra.mxu0 %v243
        %293 = vmatprep.subr.mxu0 0.0
        %294 = vmatpush1.xpose.msra.mxu0 %v244
        %295 = vmatprep.subr.mxu0 0.0
        %296 = vmatpush1.xpose.msra.mxu0 %v245
        %297 = vmatprep.subr.mxu0 0.0
        %298 = vmatpush1.xpose.msra.mxu0 %v246
        %299 = vmatprep.subr.mxu0 0.0
        %300 = vmatpush1.xpose.msra.mxu0 %v247
        %301 = vmatprep.subr.mxu0 0.0
        %302 = vmatpush1.xpose.msra.mxu0 %v248
        %303 = vmatprep.subr.mxu0 0.0
        %304 = vmatpush1.xpose.msra.mxu0 %v249
        %305 = vmatprep.subr.mxu0 0.0
        %306 = vmatpush1.xpose.msra.mxu0 %v250
        %307 = vmatprep.subr.mxu0 0.0
        %308 = vmatpush1.xpose.msra.mxu0 %v251
        %309 = vmatprep.subr.mxu0 0.0
        %310 = vmatpush1.xpose.msra.mxu0 %v252
        %311 = vmatprep.subr.mxu0 0.0
        %312 = vmatpush1.xpose.msra.mxu0 %v253
        %313 = vmatprep.subr.mxu0 0.0
        %314 = vmatpush1.xpose.msra.mxu0 %v254
        %315 = vmatprep.subr.mxu0 0.0
        %316 = vmatpush1.xpose.msra.mxu0 %v255
        %317 = vmatprep.subr.mxu0 0.0
        %318 = vmatpush1.xpose.msra.mxu0 %v256
        %319 = vmatprep.subr.mxu0 0.0
        %320 = vmatpush1.xpose.msra.mxu0 %v257
        %321 = vmatprep.subr.mxu0 0.0
        %322 = vmatpush1.xpose.msra.mxu0 %v258
        %323 = vmatprep.mubr.f32.mxu0 0.0
        %324 = vmatmul.mubr.f32.gmra.mrb[0].mxu0 1.0
        %v325 = vpop.f32.mrb[0].mxu0
        %v326 = vadd.f32 0.0, %v325
        %v327 = vpop.f32.mrb[0].mxu0
        %v328 = vadd.f32 0.0, %v327
        %329 = vdwg.mxu0
        %v330 = vmax.f32 %v326, 1e-24
        %v331 = vmax.f32 %v328, 1e-24
        %v332 = vrsqrt.pop %v330
        %v333 = vrsqrt.pop %v331
        %334 = vmatprep.subr.mxu0 0.0
        %335 = vmatpush1.xpose.msra.mxu0 %v179
        %336 = vmatprep.subr.mxu0 0.0
        %337 = vmatpush1.xpose.msra.mxu0 %v180
        %338 = vmatprep.subr.mxu0 0.0
        %339 = vmatpush1.xpose.msra.mxu0 %v181
        %340 = vmatprep.subr.mxu0 0.0
        %341 = vmatpush1.xpose.msra.mxu0 %v182
        %342 = vmatprep.subr.mxu0 0.0
        %343 = vmatpush1.xpose.msra.mxu0 %v183
        %344 = vmatprep.subr.mxu0 0.0
        %345 = vmatpush1.xpose.msra.mxu0 %v184
        %346 = vmatprep.subr.mxu0 0.0
        %347 = vmatpush1.xpose.msra.mxu0 %v185
        %348 = vmatprep.subr.mxu0 0.0
        %349 = vmatpush1.xpose.msra.mxu0 %v186
        %350 = vmatprep.subr.mxu0 0.0
        %351 = vmatpush1.xpose.msra.mxu0 %v187
        %352 = vmatprep.subr.mxu0 0.0
        %353 = vmatpush1.xpose.msra.mxu0 %v188
        %354 = vmatprep.subr.mxu0 0.0
        %355 = vmatpush1.xpose.msra.mxu0 %v189
        %356 = vmatprep.subr.mxu0 0.0
        %357 = vmatpush1.xpose.msra.mxu0 %v190
        %358 = vmatprep.subr.mxu0 0.0
        %359 = vmatpush1.xpose.msra.mxu0 %v191
        %360 = vmatprep.subr.mxu0 0.0
        %361 = vmatpush1.xpose.msra.mxu0 %v192
        %362 = vmatprep.subr.mxu0 0.0
        %363 = vmatpush1.xpose.msra.mxu0 %v193
        %364 = vmatprep.subr.mxu0 0.0
        %365 = vmatpush1.xpose.msra.mxu0 %v194
        %366 = vmatprep.subr.mxu0 0.0
        %367 = vmatpush1.xpose.msra.mxu0 %v195
        %368 = vmatprep.subr.mxu0 0.0
        %369 = vmatpush1.xpose.msra.mxu0 %v196
        %370 = vmatprep.subr.mxu0 0.0
        %371 = vmatpush1.xpose.msra.mxu0 %v197
        %372 = vmatprep.subr.mxu0 0.0
        %373 = vmatpush1.xpose.msra.mxu0 %v198
        %374 = vmatprep.subr.mxu0 0.0
        %375 = vmatpush1.xpose.msra.mxu0 %v199
        %376 = vmatprep.subr.mxu0 0.0
        %377 = vmatpush1.xpose.msra.mxu0 %v200
        %378 = vmatprep.subr.mxu0 0.0
        %379 = vmatpush1.xpose.msra.mxu0 %v201
        %380 = vmatprep.subr.mxu0 0.0
        %381 = vmatpush1.xpose.msra.mxu0 %v202
        %382 = vmatprep.subr.mxu0 0.0
        %383 = vmatpush1.xpose.msra.mxu0 %v203
        %384 = vmatprep.subr.mxu0 0.0
        %385 = vmatpush1.xpose.msra.mxu0 %v204
        %386 = vmatprep.subr.mxu0 0.0
        %387 = vmatpush1.xpose.msra.mxu0 %v205
        %388 = vmatprep.subr.mxu0 0.0
        %389 = vmatpush1.xpose.msra.mxu0 %v206
        %390 = vmatprep.subr.mxu0 0.0
        %391 = vmatpush1.xpose.msra.mxu0 %v207
        %392 = vmatprep.subr.mxu0 0.0
        %393 = vmatpush1.xpose.msra.mxu0 %v208
        %394 = vmatprep.subr.mxu0 0.0
        %395 = vmatpush1.xpose.msra.mxu0 %v209
        %396 = vmatprep.subr.mxu0 0.0
        %397 = vmatpush1.xpose.msra.mxu0 %v210
        %398 = vmatprep.mubr.f32.mxu0 0.0
        %399 = vmatmul.mubr.f32.gmra.mrb[0].mxu0 %v178
        %v400 = vpop.f32.mrb[0].mxu0
        %v401 = vadd.f32 0.0, %v400
        %v402 = vpop.f32.mrb[0].mxu0
        %v403 = vadd.f32 0.0, %v402
        %404 = vdwg.mxu0
        %v405 = vld [vmem:[#allocation2] sm:$0xff]
        %407 = vset.pattern.permute.xlu0 0
        %408 = vperm.xlu0 %407, %v405
        %v409 = vpop.permute.xlu0 %408
        %v411 = vmul.f32 %v401, %v409
        %v412 = vmul.f32 %v403, %v409
        %v413 = vlaneseq
        %v414 = vshrl.u32 %v413, 7
        %v415 = vsub.s32 0, %v414
        %v416 = vrot.slane %v332, %v415
        %v417 = vlaneseq
        %v418 = vshrl.u32 %v417, 7
        %v419 = vsub.s32 0, %v418
        %v420 = vrot.slane %v333, %v419
        %v421 = vmul.f32 %v411, %v416
        %v422 = vmul.f32 %v412, %v420
        %v423 = vlaneseq
        %v424 = vand.u32 %v423, 127
        %v425 = vadd.s32 %v424, 128
        %v426 = vstv %s212
        %v427 = vadd.s32 %v424, %v426
        %v428 = vadd.s32 %v425, %v426
        %429 = vset.pattern.permute.xlu0 0
        %430 = vperm.xlu0 %429, %v211
        %v431 = vpop.permute.xlu0 %430
        %vm432 = vcmp.eq.s32.totalorder %v427, %v431
        %vm433 = vcmp.eq.s32.totalorder %v428, %v431
        %v434 = vsel %vm432, 1, 0
        %v435 = vsel %vm433, 1, 0
        %v436 = vcvt.s32.f32 %v434
        %v437 = vcvt.s32.f32 %v435
        %vm438 = vcmp.ge.s32.totalorder %v211, %v426
        %s439 = sadd.s32 %s212, 256
        %v440 = vstv %s439
        %vm441 = vcmp.lt.s32.totalorder %v211, %v440
        %vm442 = vmand %vm438, %vm441
        %v443 = vsel %vm442, 1, 0
        %v444 = vcvt.s32.f32 %v443
        %v445 = vmul.f32 %v421, %v436
        %v446 = vmul.f32 %v422, %v437
        %v447 = vadd.f32 %v445, %v446
        %448 = vadd.xlane.f32.xlu0 %v447
        %v449 = vpop.xlane.xlu0 %448
        %v450 = vmax.f32 %v449, -0.999999
        %v451 = vmin.f32 %v450, 0.999999
        %v452 = vmul.f32 %v451, 0.87758255
        %v453 = vmul.f32 %v451, %v451
        %v454 = vsub.f32 1.0, %v453
        %v455 = vmax.f32 %v454, 0.0
        %v456 = vrsqrt.pop %v455
        %v457 = vmul.f32 %v455, %v456
        %vm458 = vcmp.eq.f32.partialorder %v455, inf
        %v459 = vsel %vm458, %v455, %v457
        %vm460 = vcmp.eq.f32.partialorder %v455, 0.0
        %v461 = vand.u32 %v455, 2147483648
        %v462 = vsel %vm460, %v461, %v459
        %v463 = vmul.f32 %v462, 0.47942555
        %v464 = vsub.f32 %v452, %v463
        %v465 = vsub.f32 %v464, %v449
        %v466 = vmul.f32 %v436, %v465
        %v467 = vmul.f32 %v437, %v465
        %v468 = vadd.f32 %v421, %v466
        %v469 = vadd.f32 %v422, %v467
        %v470 = vmul.f32 %v468, 10.0
        %v471 = vmul.f32 %v469, 10.0
        %vm472 = vcmp.lt.s32.totalorder %v427, 576
        %vm473 = vcmp.lt.s32.totalorder %v428, 576
        %v474 = vsel %vm472, %v470, -1e+30
        %v475 = vsel %vm473, %v471, -1e+30
        %v476 = vmax.f32 %v474, %v475
        %477 = vmax.xlane.f32.xlu0 %v476
        %v478 = vpop.xlane.xlu0 %477
        %v479 = vld [vmem:[#allocation3] sm:$0xff]
        %v480 = vmax.f32 %v479, %v478
        %v481 = vsub.f32 %v479, %v480
        %v482 = vmul.f32 %v481, 1.442695
        %v483 = vpow.pop %v482
        %v484 = vld [vmem:[#allocation4] sm:$0xff]
        %v485 = vmul.f32 %v483, %v484
        %487 = vset.pattern.permute.xlu0 0
        %488 = vperm.xlu0 %487, %v480
        %v489 = vpop.permute.xlu0 %488
        %v491 = vsub.f32 %v474, %v489
        %v492 = vsub.f32 %v475, %v489
        %v493 = vmul.f32 %v491, 1.442695
        %v494 = vpow.pop %v493
        %v495 = vmul.f32 %v492, 1.442695
        %v496 = vpow.pop %v495
        %v497 = vadd.f32 %v494, %v496
        %498 = vadd.xlane.f32.xlu0 %v497
        %v499 = vpop.xlane.xlu0 %498
        %v500 = vadd.f32 %v485, %v499
        %vm501 = vcmask 7168
        %502 = vst.msk [vmem:[#allocation4] sm:$0xff] %vm501, %v500
        %503 = vst.msk [vmem:[#allocation3] sm:$0xff] %vm501, %v480
        %v504 = vld [vmem:[#allocation5] sm:$0xff]
        %v505 = vmul.f32 %v464, 10.0
        %v506 = vmul.f32 %v444, %v505
        %v507 = vadd.f32 %v504, %v506
        %508 = vst.msk [vmem:[#allocation5] sm:$0xff] %vm501, %v507
        %p509 = scmp.eq.s32.totalorder %s18, 2
        // Predicated region
        $region41: #{tpu_custom_call.1} parent=31 // pred_check
          %p510 = pneg %p509
        $region42: #{tpu_custom_call.1} parent=31 // pred_check_branch
          %512 = sbr.rel (%p510) target = $region44
        $region43: #{tpu_custom_call.1} parent=31 // pred_region
          %v513 = vld [vmem:[#allocation3] sm:$0xff]
          %v514 = vld [vmem:[#allocation4] sm:$0xff]
          %v515 = vlog2.pop %v514
          %v516 = vmul.f32 %v515, 0.6931472
          %v517 = vadd.f32 %v513, %v516
          %v518 = vld [vmem:[#allocation5] sm:$0xff]
          %v519 = vsub.f32 %v517, %v518
          %v520 = vsel %vm501, %v519, 0.0
          %521 = vadd.xlane.f32.xlu0 %v520
          %v522 = vpop.xlane.xlu0 %521
          %v523 = vrot.slane %v522, 4
          %v524 = vadd.f32 %v522, %v523
          %v525 = vrot.slane %v524, 2
          %v526 = vadd.f32 %v524, %v525
          %v527 = vrot.slane %v526, 1
          %v528 = vadd.f32 %v526, %v527
          %s529 = vtos %v528
          %v530 = vstv %s529
          %v531 = vmul.f32 %v530, 0.125
          %vm532 = vcmask 0
          %533 = vst.msk [vmem:[#allocation9] sm:$0x1] %vm532, %v531
        $region44: #{tpu_custom_call.1} parent=31 // pred_fallthru
          _
        // Predicated region
        $region45: #{tpu_custom_call.1} parent=31 // pred_check
          %p534 = pneg %p99
        $region46: #{tpu_custom_call.1} parent=31 // pred_check_branch
          %536 = sbr.rel (%p534) target = $region48
        $region47: #{tpu_custom_call.1} parent=31 // pred_region
          %s538 = ssub.s32 16, 16
          %539 = vsyncadd [#allocation8], %s538
          %s541 = sshll.u32 [#allocation9], 4
          %s542 = int_to_ptr.vmem [resolvable:$true] %s541
          %544 = dma.vmem_to_hbm [thread:$0]  %s542, 16, %s3, [#allocation8]
        $region48: #{tpu_custom_call.1} parent=31 // pred_fallthru
          _
        // Predicated region
        $region49: #{tpu_custom_call.1} parent=31 // pred_check
          %p545 = pneg %p99
        $region50: #{tpu_custom_call.1} parent=31 // pred_check_branch
          %547 = sbr.rel (%p545) target = $region52
        $region51: #{tpu_custom_call.1} parent=31 // pred_region
          %548 = dma.done [#allocation8], 16
        $region52: #{tpu_custom_call.1} parent=31 // pred_fallthru
          _
      $region32: #{tpu_custom_call.1} parent=5 // pred_fallthru
        _
      %p549 = scmp.le.s32.totalorder 2, %s13
      // Predicated region
      $region53: #{tpu_custom_call.1} parent=5 // pred_check
        %p550 = pneg %p549
      $region54: #{tpu_custom_call.1} parent=5 // pred_check_branch
        %552 = sbr.rel (%p550) target = $region56
      $region55: #{tpu_custom_call.1} parent=5 // pred_region
        %s553 = ssub.s32 %s13, 2
      $region56: #{tpu_custom_call.1} parent=5 // pred_fallthru
        _
    $region6: #{tpu_custom_call.1} parent=1 // loop_footer
      %s17 = sadd.s32 1, %s13
    $region7: #{tpu_custom_call.1} parent=1 // loop_footer_branch
      %12 = sbr.rel target = $region3
    $region8: #{tpu_custom_call.1} parent=1 // loop_exit
      _
    %554 = vsyncpa [#allocation7], 1
    %s555 = scalar_lea.sflag [#allocation7], 1
    %556 = vsyncpa %s555, 1
    %557 = vsyncpa [#allocation8], 1
    %s558 = scalar_lea.sflag [#allocation8], 1
    %559 = vsyncpa %s558, 1

</llo_original>
